<compile_context>
chip_gen: v7x
topology: tpu7x:2x2x1
jax: 0.10.0
libtpu: 0.0.40
codegen_flags: <defaults>
</compile_context>

<pallas_src>
import jax
import jax.numpy as jnp
from jax import lax
from jax.experimental import pallas as pl
from jax.experimental.pallas import tpu as pltpu


def _round_up(x: int, m: int) -> int:
    return ((x + m - 1) // m) * m


def _feature_attention_kernel(x_ref, w_ref, b_ref, o_ref):
    # x_ref : [TM, L]   row tile of (possibly lane-folded) node features (VMEM)
    # w_ref : [L, L]    weight already in [K, N_out] layout (W^T / block-diag W^T)
    # b_ref : [1, L]    bias, tiled/padded to the lane layout
    # o_ref : [TM, L]
    logits = lax.dot_general(
        x_ref[...], w_ref[...],
        dimension_numbers=(((1,), (0,)), ((), ())),   # plain [M,K]@[K,N] -> MXU
        preferred_element_type=jnp.float32,
    )
    scores = jax.nn.sigmoid(logits + b_ref[...])       # EUP transcendental
    # Re-load x from VMEM here (cheap: 3 vld/cycle) instead of keeping the tile
    # live in vregs across the matmul.
    o_ref[...] = (x_ref[...].astype(jnp.float32) * scores).astype(o_ref.dtype)


def _xla_forward(x, w, b):
    return x * jax.nn.sigmoid(x @ w.T + b)


def feature_attention(x, w, b, *, target_tile_bytes=4 << 20):
    """FeatureAttention forward: sigmoid(x @ w.T + b) * x.

    x: [N, D] float32 node features
    w: [D, D] PyTorch Linear weight ([out, in] layout); out == in == D here
    b: [D]    Linear bias
    """
    N, D = x.shape
    D_out, D_in = w.shape
    assert D_in == D and D_out == D, "FeatureAttention requires a square weight"
    itemsize = jnp.dtype(x.dtype).itemsize

    # ---- choose the lane layout --------------------------------------------
    if D < 128 and 128 % D == 0 and N % (128 // D) == 0:
        fold = 128 // D            # pack `fold` rows per 128-lane row (free reshape)
        L = 128
        M = N // fold
        pad_d = 0
    else:
        fold = 1
        L = _round_up(D, 128)      # D % 128 == 0 -> no padding at all
        M = N
        pad_d = L - D

    # ---- tiny inputs: XLA fusion beats a 1-block kernel launch --------------
    if M * L * itemsize <= 128 * 1024:
        return _xla_forward(x, w, b)

    # ---- one-time operand prep (O(L^2) weight work, free reshapes for x) ----
    if fold > 1:
        x_in = x.reshape(M, L)                                   # free, row-major
        w_in = jnp.kron(jnp.eye(fold, dtype=w.dtype), w.T)       # block-diag W^T
        b_in = jnp.tile(b, fold).reshape(1, L)
    elif pad_d == 0:
        x_in = x
        w_in = w.T                                               # [K, N_out] for MXU
        b_in = b.reshape(1, L)
    else:
        # general fallback for irregular D: pad the feature axis only
        x_in = jnp.pad(x, ((0, 0), (0, pad_d)))
        w_in = jnp.pad(w.T, ((0, pad_d), (0, pad_d)))
        b_in = jnp.pad(b, (0, pad_d)).reshape(1, L)

    # ---- row tiling: MiB-scale tiles, but >=2 blocks for v7x megacore -------
    bytes_per_row = L * itemsize
    tile_m = max(8, (target_tile_bytes // bytes_per_row) // 8 * 8)
    tile_m = min(tile_m, _round_up(M, 8))
    if M > 8 and pl.cdiv(M, tile_m) < 2:
        tile_m = max(8, _round_up(pl.cdiv(M, 2), 8))

    # ---- right-size VMEM: 2x double-buffered x + out tiles, W + bias, margin
    w_bytes = L * L * itemsize
    def _need(t):
        return 4 * t * bytes_per_row + 2 * (w_bytes + L * itemsize) + (4 << 20)
    while _need(tile_m) > (48 << 20) and tile_m > 8:
        tile_m = max(8, (tile_m // 2) // 8 * 8)
    vmem_limit = int(min(max(_need(tile_m), 32 << 20), 48 << 20))

    grid = (pl.cdiv(M, tile_m),)   # ragged last block handled by Pallas masking

    cost = pl.CostEstimate(
        flops=2 * M * L * L + 2 * M * L,
        transcendentals=M * L,
        bytes_accessed=itemsize * (2 * M * L + L * L + L),
    )

    out = pl.pallas_call(
        _feature_attention_kernel,
        out_shape=jax.ShapeDtypeStruct((M, L), x.dtype),
        grid_spec=pltpu.PrefetchScalarGridSpec(
            num_scalar_prefetch=0,
            grid=grid,
            in_specs=[
                pl.BlockSpec((tile_m, L), lambda i: (i, 0)),   # x row tile
                pl.BlockSpec((L, L), lambda i: (0, 0)),        # W^T (grid-invariant)
                pl.BlockSpec((1, L), lambda i: (0, 0)),        # bias
            ],
            out_specs=pl.BlockSpec((tile_m, L), lambda i: (i, 0)),
        ),
        compiler_params=pltpu.CompilerParams(
            dimension_semantics=("parallel",),   # rows independent -> megacore on v7x
            vmem_limit_bytes=vmem_limit,
        ),
        cost_estimate=cost,
    )(x_in, w_in, b_in)

    if fold > 1:
        return out.reshape(N, D)   # free reshape back, no slice pass
    if pad_d:
        return out[:, :D]
    return out


def feature_attention_ref(x, w, b):
    # Pure-JAX reference reproducing torch.nn.Linear + Sigmoid + x * scores.
    return x * jax.nn.sigmoid(x @ w.T + b)


if __name__ == "__main__":
    key = jax.random.PRNGKey(0)
    k_x, k_w, k_b, k_x2 = jax.random.split(key, 4)

    # input_dim == ref_graph_data.x.size(1); use 32-dim node features.
    D = 32
    bound = 1.0 / jnp.sqrt(jnp.float32(D))
    w = jax.random.uniform(k_w, (D, D), jnp.float32, -bound, bound)
    b = jax.random.uniform(k_b, (D,), jnp.float32, -bound, bound)

    # Case 1: tiny graph (8 nodes) -> small-N fast path (XLA fusion).
    x_small = jax.random.normal(k_x, (8, D), dtype=jnp.float32)
    out_small = jax.block_until_ready(feature_attention(x_small, w, b))
    ref_small = feature_attention_ref(x_small, w, b)
    assert out_small.shape == (8, D)
    assert jnp.allclose(out_small, ref_small, atol=1e-5, rtol=1e-5), "small-path mismatch"

    # Case 2: larger node count -> Pallas kernel (lane-fold path, multi-tile grid).
    x_big = jax.random.normal(k_x2, (4096, D), dtype=jnp.float32)
    out_big = jax.block_until_ready(feature_attention(x_big, w, b))
    ref_big = feature_attention_ref(x_big, w, b)
    assert out_big.shape == (4096, D)
    assert jnp.allclose(out_big, ref_big, atol=1e-5, rtol=1e-5), "kernel mismatch vs reference"

    print("KERNEL_OK")
</pallas_src>

<mosaic_0001>
module attributes {stable_mosaic.version = 11 : i64} {
  func.func @_feature_attention_kernel(%arg0: i32, %arg1: memref<512x128xf32, #tpu.memory_space<vmem>>, %arg2: memref<128x128xf32, #tpu.memory_space<vmem>>, %arg3: memref<1x128xf32, #tpu.memory_space<vmem>>, %arg4: memref<512x128xf32, #tpu.memory_space<vmem>>) attributes {dimension_semantics = [#tpu.dimension_semantics<parallel>], iteration_bounds = array<i64: 2>, scalar_prefetch = 0 : i64, scratch_operands = 0 : i64, tpu.core_type = #tpu.core_type<tc>, window_params = [{transform_indices = @transform_0, window_bounds = array<i64: 512, 128>}, {pipeline_mode = #tpu.pipeline_mode<synchronous>, transform_indices = @transform_1, window_bounds = array<i64: 128, 128>}, {pipeline_mode = #tpu.pipeline_mode<synchronous>, transform_indices = @transform_2, window_bounds = array<i64: 1, 128>}, {transform_indices = @transform_3, window_bounds = array<i64: 512, 128>}]} {
    %c0 = arith.constant 0 : index
    %c0_0 = arith.constant 0 : index
    %0 = vector.load %arg1[%c0, %c0_0] : memref<512x128xf32, #tpu.memory_space<vmem>>, vector<512x128xf32>
    %c0_1 = arith.constant 0 : index
    %c0_2 = arith.constant 0 : index
    %1 = vector.load %arg2[%c0_1, %c0_2] : memref<128x128xf32, #tpu.memory_space<vmem>>, vector<128x128xf32>
    %cst = arith.constant dense<0.000000e+00> : vector<512x128xf32>
    %2 = tpu.matmul %0, %1, %cst {dimension_numbers = #tpu.dot_dimension_numbers<[1], [0], [0], [1], [0, 0, 1, 1], [], []>} : vector<512x128xf32>, vector<128x128xf32>, vector<512x128xf32> -> vector<512x128xf32>
    %c0_3 = arith.constant 0 : index
    %c0_4 = arith.constant 0 : index
    %3 = vector.load %arg3[%c0_3, %c0_4] : memref<1x128xf32, #tpu.memory_space<vmem>>, vector<1x128xf32>
    %4 = vector.broadcast %3 : vector<1x128xf32> to vector<512x128xf32>
    %5 = arith.addf %2, %4 : vector<512x128xf32>
    %6 = arith.negf %5 : vector<512x128xf32>
    %7 = math.exp %6 : vector<512x128xf32>
    %cst_5 = arith.constant 1.000000e+00 : f32
    %8 = vector.broadcast %cst_5 : f32 to vector<512x128xf32>
    %9 = arith.addf %8, %7 : vector<512x128xf32>
    %10 = arith.divf %8, %9 : vector<512x128xf32>
    %c0_6 = arith.constant 0 : index
    %c0_7 = arith.constant 0 : index
    %11 = vector.load %arg1[%c0_6, %c0_7] : memref<512x128xf32, #tpu.memory_space<vmem>>, vector<512x128xf32>
    %12 = arith.mulf %11, %10 : vector<512x128xf32>
    %c0_8 = arith.constant 0 : index
    %c0_9 = arith.constant 0 : index
    %13 = vector.load %arg4[%c0_8, %c0_9] : memref<512x128xf32, #tpu.memory_space<vmem>>, vector<512x128xf32>
    tpu.vector_store %arg4[%c0_8, %c0_9], %12 {strides = array<i32>} : memref<512x128xf32, #tpu.memory_space<vmem>>, vector<512x128xf32>,
    return
  }
  func.func @transform_0(%arg0: i32) -> (i32, i32) {
    %c0_i32 = arith.constant 0 : i32
    %c0_i32_0 = arith.constant 0 : i32
    return %arg0, %c0_i32 : i32, i32
  }
  func.func @transform_1(%arg0: i32) -> (i32, i32) {
    %c0_i32 = arith.constant 0 : i32
    %c0_i32_0 = arith.constant 0 : i32
    %c0_i32_1 = arith.constant 0 : i32
    return %c0_i32, %c0_i32_0 : i32, i32
  }
  func.func @transform_2(%arg0: i32) -> (i32, i32) {
    %c0_i32 = arith.constant 0 : i32
    %c0_i32_0 = arith.constant 0 : i32
    %c0_i32_1 = arith.constant 0 : i32
    return %c0_i32, %c0_i32_0 : i32, i32
  }
  func.func @transform_3(%arg0: i32) -> (i32, i32) {
    %c0_i32 = arith.constant 0 : i32
    %c0_i32_0 = arith.constant 0 : i32
    return %arg0, %c0_i32 : i32, i32
  }
}

</mosaic_0001>

<llo_original>
// kernel: tpu_custom_call.1
$region0: #{tpu_custom_call.1}
  #allocation0 [shape = 'u32[]', space=smem, size = 0x4, offset = 0x4, fixed_abs, tag = 'smem constant byte address 0x4 - core index']
  #allocation1 [shape = 'u32[144,128]{1,0:T(1,128)}', space=vmem, size = 0x12000, scoped, tag = 'internal scratch']
  %s0 = inlined_call_operand.hbm [shape: f32[1024,128], index: 0, kind: input, shape index: {}]
  %s1 = inlined_call_operand.hbm [shape: f32[128,128], index: 1, kind: input, shape index: {}]
  %s2 = inlined_call_operand.vmem [shape: f32[1,128], index: 2, kind: input, shape index: {}]
  %s3 = inlined_call_operand.hbm [shape: f32[1024,128], index: 3, kind: output, shape index: {}]
  %s4 = sld [smem:[#allocation0]]
  $region53: #{tpu_custom_call.1} parent=0
    _
  %s6 = ssub.s32 1, %s4
  %s7 = scalar_select 0, %s6, %s4
  $region1: #{tpu_custom_call.1} parent=0
    #allocation2 [shape = 'u8[524288]{0}', space=vmem, size = 0x80000, scoped, tag = 'input window, operand 0']
    #allocation3 [shape = 's32[2]{0}', space=sflag, size = 0x8, scoped, tag = 'scoped memory for tpu_custom_call.1']
    #allocation4 [shape = 's32[2]{0}', space=sflag, size = 0x8, scoped, tag = 'scoped memory for tpu_custom_call.1']
    #allocation5 [shape = 'u8[65536]{0}', space=vmem, size = 0x10000, scoped, tag = 'input window, operand 1, single buffered']
    #allocation6 [shape = 's32[1]{0}', space=sflag, size = 0x4, scoped, tag = 'scoped memory for tpu_custom_call.1']
    #allocation7 [shape = 'u8[524288]{0}', space=vmem, size = 0x80000, scoped, tag = 'output window, operand 0']
    %8 = vsyncpa [#allocation3], 0
    %s9 = scalar_lea.sflag [#allocation3], 1
    %10 = vsyncpa %s9, 0
    %11 = vsyncpa [#allocation6], 0
    %12 = vsyncpa [#allocation4], 0
    %s13 = scalar_lea.sflag [#allocation4], 1
    %14 = vsyncpa %s13, 0
    loop: start=0, step=1, limit=4
    $region2: #{tpu_custom_call.1} parent=1 // loop_pre_header
      _
    $region3: #{tpu_custom_call.1} parent=1 // loop_header
      %s16 = sphi 0, %s20
      %p17 = scmp.ge.s32.totalorder %s16, 4
      %s26 = sphi 0, %s28
      %s29 = sphi 0, %s26
      %s30 = sphi 0, %s29
      %s46 = sphi 0, %s30
      %s50 = sphi 0, %s50
      %s52 = sphi 0, %s50
      %s53 = sphi 0, %s52
      %s67 = sphi 0, %s53
      %s71 = sphi 0, %s71
      %s73 = sphi 0, %s71
      %s74 = sphi 0, %s73
      %s88 = sphi 0, %s74
      %s94 = sphi 0, %s96
      %s97 = sphi 0, %s94
      %s98 = sphi 0, %s97
      %s114 = sphi 0, %s98
    $region4: #{tpu_custom_call.1} parent=1 // loop_header_branch
      %19 = sbr.rel (%p17) target = $region8
    $region5: #{tpu_custom_call.1} parent=1 // loop_body
      %s21 = ssub.s32 %s16, 1
      %s22 = ssub.s32 %s16, 2
      %s23 = sadd.s32 %s16, 1
      %s24 = ssub.s32 %s16, %s23
      %p25 = scmp.eq.s32.totalorder %s24, 0
      %s27 = sadd.s32 %s26, 1
      %s28 = scalar_select %p25, %s26, %s27
      %p31 = pneg %p25
      %p32 = scmp.eq.s32.totalorder %s16, 1
      %p33 = por %p31, %p32
      %p34 = scmp.ne.s32.totalorder %s26, %s29
      %p35 = scmp.eq.s32.totalorder %s16, 0
      %p36 = por %p34, %p35
      %p37 = scmp.ne.s32.totalorder %s26, %s29
      %p38 = scmp.eq.s32.totalorder %s21, 1
      %p39 = por %p37, %p38
      %p40 = scmp.ne.s32.totalorder %s29, %s30
      %p41 = scmp.eq.s32.totalorder %s21, 0
      %p42 = por %p40, %p41
      %p43 = scmp.ne.s32.totalorder %s29, %s30
      %p44 = scmp.eq.s32.totalorder %s22, 1
      %p45 = por %p43, %p44
      %p47 = scmp.ne.s32.totalorder %s30, %s46
      %p48 = scmp.eq.s32.totalorder %s22, 0
      %p49 = por %p47, %p48
      %s51 = sadd.s32 %s50, 1
      %p54 = scmp.eq.s32.totalorder %s16, 1
      %p55 = scmp.ne.s32.totalorder %s50, %s52
      %p56 = scmp.eq.s32.totalorder %s16, 0
      %p57 = por %p55, %p56
      %p58 = scmp.ne.s32.totalorder %s50, %s52
      %p59 = scmp.eq.s32.totalorder %s21, 1
      %p60 = por %p58, %p59
      %p61 = scmp.ne.s32.totalorder %s52, %s53
      %p62 = scmp.eq.s32.totalorder %s21, 0
      %p63 = por %p61, %p62
      %p64 = scmp.ne.s32.totalorder %s52, %s53
      %p65 = scmp.eq.s32.totalorder %s22, 1
      %p66 = por %p64, %p65
      %p68 = scmp.ne.s32.totalorder %s53, %s67
      %p69 = scmp.eq.s32.totalorder %s22, 0
      %p70 = por %p68, %p69
      %s72 = sadd.s32 %s71, 1
      %p75 = scmp.eq.s32.totalorder %s16, 1
      %p76 = scmp.ne.s32.totalorder %s71, %s73
      %p77 = scmp.eq.s32.totalorder %s16, 0
      %p78 = por %p76, %p77
      %p79 = scmp.ne.s32.totalorder %s71, %s73
      %p80 = scmp.eq.s32.totalorder %s21, 1
      %p81 = por %p79, %p80
      %p82 = scmp.ne.s32.totalorder %s73, %s74
      %p83 = scmp.eq.s32.totalorder %s21, 0
      %p84 = por %p82, %p83
      %p85 = scmp.ne.s32.totalorder %s73, %s74
      %p86 = scmp.eq.s32.totalorder %s22, 1
      %p87 = por %p85, %p86
      %p89 = scmp.ne.s32.totalorder %s74, %s88
      %p90 = scmp.eq.s32.totalorder %s22, 0
      %p91 = por %p89, %p90
      %s92 = ssub.s32 %s16, %s23
      %p93 = scmp.eq.s32.totalorder %s92, 0
      %s95 = sadd.s32 %s94, 1
      %s96 = scalar_select %p93, %s94, %s95
      %p99 = pneg %p93
      %p100 = scmp.eq.s32.totalorder %s16, 1
      %p101 = por %p99, %p100
      %p102 = scmp.ne.s32.totalorder %s94, %s97
      %p103 = scmp.eq.s32.totalorder %s16, 0
      %p104 = por %p102, %p103
      %p105 = scmp.ne.s32.totalorder %s94, %s97
      %p106 = scmp.eq.s32.totalorder %s21, 1
      %p107 = por %p105, %p106
      %p108 = scmp.ne.s32.totalorder %s97, %s98
      %p109 = scmp.eq.s32.totalorder %s21, 0
      %p110 = por %p108, %p109
      %p111 = scmp.ne.s32.totalorder %s97, %s98
      %p112 = scmp.eq.s32.totalorder %s22, 1
      %p113 = por %p111, %p112
      %p115 = scmp.ne.s32.totalorder %s98, %s114
      %p116 = scmp.eq.s32.totalorder %s22, 0
      %p117 = por %p115, %p116
      %p118 = scmp.le.s32.totalorder 1, %s16
      %p119 = scmp.lt.s32.totalorder %s16, 3
      %p120 = pnand %p118, %p119
      %p121 = pneg %p120
      // Predicated region
      $region9: #{tpu_custom_call.1} parent=5 // pred_check
        _
      $region10: #{tpu_custom_call.1} parent=5 // pred_check_branch
        %123 = sbr.rel (%p120) target = $region12
      $region11: #{tpu_custom_call.1} parent=5 // pred_region
        %s124 = ssub.s32 %s16, 1
        // Predicated region
        $region13: #{tpu_custom_call.1} parent=11 // pred_check
          %p125 = pneg %p63
        $region14: #{tpu_custom_call.1} parent=11 // pred_check_branch
          %127 = sbr.rel (%p125) target = $region16
        $region15: #{tpu_custom_call.1} parent=11 // pred_region
          %s129 = ssub.s32 2048, 2048
          %130 = vsyncadd [#allocation6], %s129
          %s131 = sshll.u32 [#allocation5], 4
          %s132 = int_to_ptr.vmem [resolvable:$true] %s131
          %137 = dma.hbm_to_vmem [thread:$0]  %s1, 2048, %s132, [#allocation6], 128, 128, 8
        $region16: #{tpu_custom_call.1} parent=11 // pred_fallthru
          _
        // Predicated region
        $region17: #{tpu_custom_call.1} parent=11 // pred_check
          %p138 = pneg %p84
        $region18: #{tpu_custom_call.1} parent=11 // pred_check_branch
          %140 = sbr.rel (%p138) target = $region20
        $region19: #{tpu_custom_call.1} parent=11 // pred_region
          _
        $region20: #{tpu_custom_call.1} parent=11 // pred_fallthru
          _
      $region12: #{tpu_custom_call.1} parent=5 // pred_fallthru
        _
      %p141 = scmp.lt.s32.totalorder %s16, 2
      // Predicated region
      $region21: #{tpu_custom_call.1} parent=5 // pred_check
        %p142 = pneg %p141
      $region22: #{tpu_custom_call.1} parent=5 // pred_check_branch
        %144 = sbr.rel (%p142) target = $region24
      $region23: #{tpu_custom_call.1} parent=5 // pred_region
        // Predicated region
        $region25: #{tpu_custom_call.1} parent=23 // pred_check
          %p145 = pneg %p36
        $region26: #{tpu_custom_call.1} parent=23 // pred_check_branch
          %147 = sbr.rel (%p145) target = $region28
        $region27: #{tpu_custom_call.1} parent=23 // pred_region
          %s148 = sand.u32 %s26, 1
          %s149 = scalar_lea.sflag [#allocation3], %s148
          %s150 = sand.u32 %s26, 1
          %s151 = smul.addr %s150, 512
          %s152 = scalar_lea.vmem [#allocation2], %s151
          %s153 = smul.u32 64, %s16
          %s155 = ssub.s32 8192, 8192
          %156 = vsyncadd %s149, %s155
          %s157 = smul.addr %s153, 128
          %s158 = scalar_lea.hbm %s0, %s157
          %s159 = sshll.u32 %s152, 4
          %s160 = int_to_ptr.vmem [resolvable:$true] %s159
          %165 = dma.hbm_to_vmem [thread:$0]  %s158, 8192, %s160, %s149, 128, 128, 8
        $region28: #{tpu_custom_call.1} parent=23 // pred_fallthru
          _
      $region24: #{tpu_custom_call.1} parent=5 // pred_fallthru
        _
      %p166 = scmp.le.s32.totalorder 1, %s16
      %p167 = scmp.lt.s32.totalorder %s16, 3
      %p168 = pnand %p166, %p167
      %p169 = pneg %p168
      // Predicated region
      $region29: #{tpu_custom_call.1} parent=5 // pred_check
        _
      $region30: #{tpu_custom_call.1} parent=5 // pred_check_branch
        %171 = sbr.rel (%p168) target = $region32
      $region31: #{tpu_custom_call.1} parent=5 // pred_region
        %s172 = ssub.s32 %s16, 1
        %s173 = sand.u32 %s29, 1
        %s174 = scalar_lea.sflag [#allocation3], %s173
        %s175 = sand.u32 %s29, 1
        %s176 = smul.addr %s175, 512
        %s177 = scalar_lea.vmem [#allocation2], %s176
        // Predicated region
        $region33: #{tpu_custom_call.1} parent=31 // pred_check
          %p178 = pneg %p42
        $region34: #{tpu_custom_call.1} parent=31 // pred_check_branch
          %180 = sbr.rel (%p178) target = $region36
        $region35: #{tpu_custom_call.1} parent=31 // pred_region
          %181 = dma.done %s174, 8192
        $region36: #{tpu_custom_call.1} parent=31 // pred_fallthru
          _
        // Predicated region
        $region37: #{tpu_custom_call.1} parent=31 // pred_check
          %p182 = pneg %p63
        $region38: #{tpu_custom_call.1} parent=31 // pred_check_branch
          %184 = sbr.rel (%p182) target = $region40
        $region39: #{tpu_custom_call.1} parent=31 // pred_region
          %185 = dma.done [#allocation6], 2048
        $region40: #{tpu_custom_call.1} parent=31 // pred_fallthru
          _
        %s186 = sand.u32 %s29, 1
        %s187 = scalar_lea.sflag [#allocation3], %s186
        %s188 = sand.u32 %s29, 1
        %s189 = smul.addr %s188, 512
        %s190 = scalar_lea.vmem [#allocation2], %s189
        %p191 = pneg %p42
        %p192 = pneg %p39
        %p193 = pneg %p63
        %p194 = pneg %p60
        %p195 = pneg %p84
        %p196 = pneg %p81
        %p197 = pneg %p110
        %p198 = pneg %p107
        %s199 = sand.u32 %s97, 1
        %s200 = scalar_lea.sflag [#allocation4], %s199
        %s201 = sand.u32 %s97, 1
        %s202 = smul.addr %s201, 512
        %s203 = scalar_lea.vmem [#allocation7], %s202
        %s204 = smul.u32 64, %s21
        %s205 = smul.u32 64, %s21
        %v206 = vld [vmem:[%s177] sm:$0xff]
        %v207 = vld [vmem:[%s177 + $0x8] sm:$0xff]
        %v208 = vld [vmem:[%s177 + $0x10] sm:$0xff]
        %v209 = vld [vmem:[%s177 + $0x18] sm:$0xff]
        %v210 = vld [vmem:[%s177 + $0x20] sm:$0xff]
        %v211 = vld [vmem:[%s177 + $0x28] sm:$0xff]
        %v212 = vld [vmem:[%s177 + $0x30] sm:$0xff]
        %v213 = vld [vmem:[%s177 + $0x38] sm:$0xff]
        %v214 = vld [vmem:[%s177 + $0x40] sm:$0xff]
        %v215 = vld [vmem:[%s177 + $0x48] sm:$0xff]
        %v216 = vld [vmem:[%s177 + $0x50] sm:$0xff]
        %v217 = vld [vmem:[%s177 + $0x58] sm:$0xff]
        %v218 = vld [vmem:[%s177 + $0x60] sm:$0xff]
        %v219 = vld [vmem:[%s177 + $0x68] sm:$0xff]
        %v220 = vld [vmem:[%s177 + $0x70] sm:$0xff]
        %v221 = vld [vmem:[%s177 + $0x78] sm:$0xff]
        %v222 = vld [vmem:[%s177 + $0x80] sm:$0xff]
        %v223 = vld [vmem:[%s177 + $0x88] sm:$0xff]
        %v224 = vld [vmem:[%s177 + $0x90] sm:$0xff]
        %v225 = vld [vmem:[%s177 + $0x98] sm:$0xff]
        %v226 = vld [vmem:[%s177 + $0xa0] sm:$0xff]
        %v227 = vld [vmem:[%s177 + $0xa8] sm:$0xff]
        %v228 = vld [vmem:[%s177 + $0xb0] sm:$0xff]
        %v229 = vld [vmem:[%s177 + $0xb8] sm:$0xff]
        %v230 = vld [vmem:[%s177 + $0xc0] sm:$0xff]
        %v231 = vld [vmem:[%s177 + $0xc8] sm:$0xff]
        %v232 = vld [vmem:[%s177 + $0xd0] sm:$0xff]
        %v233 = vld [vmem:[%s177 + $0xd8] sm:$0xff]
        %v234 = vld [vmem:[%s177 + $0xe0] sm:$0xff]
        %v235 = vld [vmem:[%s177 + $0xe8] sm:$0xff]
        %v236 = vld [vmem:[%s177 + $0xf0] sm:$0xff]
        %v237 = vld [vmem:[%s177 + $0xf8] sm:$0xff]
        %v238 = vld [vmem:[%s177 + $0x100] sm:$0xff]
        %v239 = vld [vmem:[%s177 + $0x108] sm:$0xff]
        %v240 = vld [vmem:[%s177 + $0x110] sm:$0xff]
        %v241 = vld [vmem:[%s177 + $0x118] sm:$0xff]
        %v242 = vld [vmem:[%s177 + $0x120] sm:$0xff]
        %v243 = vld [vmem:[%s177 + $0x128] sm:$0xff]
        %v244 = vld [vmem:[%s177 + $0x130] sm:$0xff]
        %v245 = vld [vmem:[%s177 + $0x138] sm:$0xff]
        %v246 = vld [vmem:[%s177 + $0x140] sm:$0xff]
        %v247 = vld [vmem:[%s177 + $0x148] sm:$0xff]
        %v248 = vld [vmem:[%s177 + $0x150] sm:$0xff]
        %v249 = vld [vmem:[%s177 + $0x158] sm:$0xff]
        %v250 = vld [vmem:[%s177 + $0x160] sm:$0xff]
        %v251 = vld [vmem:[%s177 + $0x168] sm:$0xff]
        %v252 = vld [vmem:[%s177 + $0x170] sm:$0xff]
        %v253 = vld [vmem:[%s177 + $0x178] sm:$0xff]
        %v254 = vld [vmem:[%s177 + $0x180] sm:$0xff]
        %v255 = vld [vmem:[%s177 + $0x188] sm:$0xff]
        %v256 = vld [vmem:[%s177 + $0x190] sm:$0xff]
        %v257 = vld [vmem:[%s177 + $0x198] sm:$0xff]
        %v258 = vld [vmem:[%s177 + $0x1a0] sm:$0xff]
        %v259 = vld [vmem:[%s177 + $0x1a8] sm:$0xff]
        %v260 = vld [vmem:[%s177 + $0x1b0] sm:$0xff]
        %v261 = vld [vmem:[%s177 + $0x1b8] sm:$0xff]
        %v262 = vld [vmem:[%s177 + $0x1c0] sm:$0xff]
        %v263 = vld [vmem:[%s177 + $0x1c8] sm:$0xff]
        %v264 = vld [vmem:[%s177 + $0x1d0] sm:$0xff]
        %v265 = vld [vmem:[%s177 + $0x1d8] sm:$0xff]
        %v266 = vld [vmem:[%s177 + $0x1e0] sm:$0xff]
        %v267 = vld [vmem:[%s177 + $0x1e8] sm:$0xff]
        %v268 = vld [vmem:[%s177 + $0x1f0] sm:$0xff]
        %v269 = vld [vmem:[%s177 + $0x1f8] sm:$0xff]
        %v270 = vld [vmem:[#allocation5] sm:$0xff]
        %v271 = vld [vmem:[#allocation5 + $0x8] sm:$0xff]
        %v272 = vld [vmem:[#allocation5 + $0x10] sm:$0xff]
        %v273 = vld [vmem:[#allocation5 + $0x18] sm:$0xff]
        %v274 = vld [vmem:[#allocation5 + $0x20] sm:$0xff]
        %v275 = vld [vmem:[#allocation5 + $0x28] sm:$0xff]
        %v276 = vld [vmem:[#allocation5 + $0x30] sm:$0xff]
        %v277 = vld [vmem:[#allocation5 + $0x38] sm:$0xff]
        %v278 = vld [vmem:[#allocation5 + $0x40] sm:$0xff]
        %v279 = vld [vmem:[#allocation5 + $0x48] sm:$0xff]
        %v280 = vld [vmem:[#allocation5 + $0x50] sm:$0xff]
        %v281 = vld [vmem:[#allocation5 + $0x58] sm:$0xff]
        %v282 = vld [vmem:[#allocation5 + $0x60] sm:$0xff]
        %v283 = vld [vmem:[#allocation5 + $0x68] sm:$0xff]
        %v284 = vld [vmem:[#allocation5 + $0x70] sm:$0xff]
        %v285 = vld [vmem:[#allocation5 + $0x78] sm:$0xff]
        %v286 = vld [vmem:[%s2] sm:$0x1]
        %v288 = vlaneseq
        %v289 = vshrl.u32 %v288, 7
        %v290 = vsub.s32 0, %v289
        %v291 = vrot.slane %v286, %v290
        %293 = vmatprep.subr.mxu0 0.0
        %294 = vmatpush1.msra.mxu0 %v270
        %295 = vmatprep.subr.mxu0 0.0
        %296 = vmatpush1.msra.mxu0 %v271
        %297 = vmatprep.subr.mxu0 0.0
        %298 = vmatpush1.msra.mxu0 %v272
        %299 = vmatprep.subr.mxu0 0.0
        %300 = vmatpush1.msra.mxu0 %v273
        %301 = vmatprep.subr.mxu0 0.0
        %302 = vmatpush1.msra.mxu0 %v274
        %303 = vmatprep.subr.mxu0 0.0
        %304 = vmatpush1.msra.mxu0 %v275
        %305 = vmatprep.subr.mxu0 0.0
        %306 = vmatpush1.msra.mxu0 %v276
        %307 = vmatprep.subr.mxu0 0.0
        %308 = vmatpush1.msra.mxu0 %v277
        %309 = vmatprep.subr.mxu0 0.0
        %310 = vmatpush1.msra.mxu0 %v278
        %311 = vmatprep.subr.mxu0 0.0
        %312 = vmatpush1.msra.mxu0 %v279
        %313 = vmatprep.subr.mxu0 0.0
        %314 = vmatpush1.msra.mxu0 %v280
        %315 = vmatprep.subr.mxu0 0.0
        %316 = vmatpush1.msra.mxu0 %v281
        %317 = vmatprep.subr.mxu0 0.0
        %318 = vmatpush1.msra.mxu0 %v282
        %319 = vmatprep.subr.mxu0 0.0
        %320 = vmatpush1.msra.mxu0 %v283
        %321 = vmatprep.subr.mxu0 0.0
        %322 = vmatpush1.msra.mxu0 %v284
        %323 = vmatprep.subr.mxu0 0.0
        %324 = vmatpush1.msra.mxu0 %v285
        %325 = vmatprep.subr.mxu0 0.0
        %326 = vmatpush1.msra.mxu0 0.0
        %327 = vmatprep.subr.mxu0 0.0
        %328 = vmatpush1.msra.mxu0 0.0
        %329 = vmatprep.subr.mxu0 0.0
        %330 = vmatpush1.msra.mxu0 0.0
        %331 = vmatprep.subr.mxu0 0.0
        %332 = vmatpush1.msra.mxu0 0.0
        %333 = vmatprep.subr.mxu0 0.0
        %334 = vmatpush1.msra.mxu0 0.0
        %335 = vmatprep.subr.mxu0 0.0
        %336 = vmatpush1.msra.mxu0 0.0
        %337 = vmatprep.subr.mxu0 0.0
        %338 = vmatpush1.msra.mxu0 0.0
        %339 = vmatprep.subr.mxu0 0.0
        %340 = vmatpush1.msra.mxu0 0.0
        %341 = vmatprep.subr.mxu0 0.0
        %342 = vmatpush1.msra.mxu0 0.0
        %343 = vmatprep.subr.mxu0 0.0
        %344 = vmatpush1.msra.mxu0 0.0
        %345 = vmatprep.subr.mxu0 0.0
        %346 = vmatpush1.msra.mxu0 0.0
        %347 = vmatprep.subr.mxu0 0.0
        %348 = vmatpush1.msra.mxu0 0.0
        %349 = vmatprep.subr.mxu0 0.0
        %350 = vmatpush1.msra.mxu0 0.0
        %351 = vmatprep.subr.mxu0 0.0
        %352 = vmatpush1.msra.mxu0 0.0
        %353 = vmatprep.subr.mxu0 0.0
        %354 = vmatpush1.msra.mxu0 0.0
        %355 = vmatprep.subr.mxu0 0.0
        %356 = vmatpush1.msra.mxu0 0.0
        %357 = vmatprep.mubr.f32.mxu0 0.0
        %358 = vmatmul.mubr.f32.gmra.mrb[0].mxu0 %v206
        %v359 = vpop.f32.mrb[0].mxu0
        %v360 = vadd.f32 %v291, %v359
        %v361 = vpop.f32.mrb[0].mxu0
        %362 = vmatprep.mubr.f32.mxu0 0.0
        %363 = vmatmul.mubr.f32.gmra.mrb[0].mxu0 %v207
        %v364 = vpop.f32.mrb[0].mxu0
        %v365 = vadd.f32 %v291, %v364
        %v366 = vpop.f32.mrb[0].mxu0
        %367 = vmatprep.mubr.f32.mxu0 0.0
        %368 = vmatmul.mubr.f32.gmra.mrb[0].mxu0 %v208
        %v369 = vpop.f32.mrb[0].mxu0
        %v370 = vadd.f32 %v291, %v369
        %v371 = vpop.f32.mrb[0].mxu0
        %372 = vmatprep.mubr.f32.mxu0 0.0
        %373 = vmatmul.mubr.f32.gmra.mrb[0].mxu0 %v209
        %v374 = vpop.f32.mrb[0].mxu0
        %v375 = vadd.f32 %v291, %v374
        %v376 = vpop.f32.mrb[0].mxu0
        %377 = vmatprep.mubr.f32.mxu0 0.0
        %378 = vmatmul.mubr.f32.gmra.mrb[0].mxu0 %v210
        %v379 = vpop.f32.mrb[0].mxu0
        %v380 = vadd.f32 %v291, %v379
        %v381 = vpop.f32.mrb[0].mxu0
        %382 = vmatprep.mubr.f32.mxu0 0.0
        %383 = vmatmul.mubr.f32.gmra.mrb[0].mxu0 %v211
        %v384 = vpop.f32.mrb[0].mxu0
        %v385 = vadd.f32 %v291, %v384
        %v386 = vpop.f32.mrb[0].mxu0
        %387 = vmatprep.mubr.f32.mxu0 0.0
        %388 = vmatmul.mubr.f32.gmra.mrb[0].mxu0 %v212
        %v389 = vpop.f32.mrb[0].mxu0
        %v390 = vadd.f32 %v291, %v389
        %v391 = vpop.f32.mrb[0].mxu0
        %392 = vmatprep.mubr.f32.mxu0 0.0
        %393 = vmatmul.mubr.f32.gmra.mrb[0].mxu0 %v213
        %v394 = vpop.f32.mrb[0].mxu0
        %v395 = vadd.f32 %v291, %v394
        %v396 = vpop.f32.mrb[0].mxu0
        %397 = vmatprep.mubr.f32.mxu0 0.0
        %398 = vmatmul.mubr.f32.gmra.mrb[0].mxu0 %v214
        %v399 = vpop.f32.mrb[0].mxu0
        %v400 = vadd.f32 %v291, %v399
        %v401 = vpop.f32.mrb[0].mxu0
        %402 = vmatprep.mubr.f32.mxu0 0.0
        %403 = vmatmul.mubr.f32.gmra.mrb[0].mxu0 %v215
        %v404 = vpop.f32.mrb[0].mxu0
        %v405 = vadd.f32 %v291, %v404
        %v406 = vpop.f32.mrb[0].mxu0
        %407 = vmatprep.mubr.f32.mxu0 0.0
        %408 = vmatmul.mubr.f32.gmra.mrb[0].mxu0 %v216
        %v409 = vpop.f32.mrb[0].mxu0
        %v410 = vadd.f32 %v291, %v409
        %v411 = vpop.f32.mrb[0].mxu0
        %412 = vmatprep.mubr.f32.mxu0 0.0
        %413 = vmatmul.mubr.f32.gmra.mrb[0].mxu0 %v217
        %v414 = vpop.f32.mrb[0].mxu0
        %v415 = vadd.f32 %v291, %v414
        %v416 = vpop.f32.mrb[0].mxu0
        %417 = vmatprep.mubr.f32.mxu0 0.0
        %418 = vmatmul.mubr.f32.gmra.mrb[0].mxu0 %v218
        %v419 = vpop.f32.mrb[0].mxu0
        %v420 = vadd.f32 %v291, %v419
        %v421 = vpop.f32.mrb[0].mxu0
        %422 = vmatprep.mubr.f32.mxu0 0.0
        %423 = vmatmul.mubr.f32.gmra.mrb[0].mxu0 %v219
        %v424 = vpop.f32.mrb[0].mxu0
        %v425 = vadd.f32 %v291, %v424
        %v426 = vpop.f32.mrb[0].mxu0
        %427 = vmatprep.mubr.f32.mxu0 0.0
        %428 = vmatmul.mubr.f32.gmra.mrb[0].mxu0 %v220
        %v429 = vpop.f32.mrb[0].mxu0
        %v430 = vadd.f32 %v291, %v429
        %v431 = vpop.f32.mrb[0].mxu0
        %432 = vmatprep.mubr.f32.mxu0 0.0
        %433 = vmatmul.mubr.f32.gmra.mrb[0].mxu0 %v221
        %v434 = vpop.f32.mrb[0].mxu0
        %v435 = vadd.f32 %v291, %v434
        %v436 = vpop.f32.mrb[0].mxu0
        %437 = vmatprep.mubr.f32.mxu0 0.0
        %438 = vmatmul.mubr.f32.gmra.mrb[0].mxu0 %v222
        %v439 = vpop.f32.mrb[0].mxu0
        %v440 = vadd.f32 %v291, %v439
        %v441 = vpop.f32.mrb[0].mxu0
        %442 = vmatprep.mubr.f32.mxu0 0.0
        %443 = vmatmul.mubr.f32.gmra.mrb[0].mxu0 %v223
        %v444 = vpop.f32.mrb[0].mxu0
        %v445 = vadd.f32 %v291, %v444
        %v446 = vpop.f32.mrb[0].mxu0
        %447 = vmatprep.mubr.f32.mxu0 0.0
        %448 = vmatmul.mubr.f32.gmra.mrb[0].mxu0 %v224
        %v449 = vpop.f32.mrb[0].mxu0
        %v450 = vadd.f32 %v291, %v449
        %v451 = vpop.f32.mrb[0].mxu0
        %452 = vmatprep.mubr.f32.mxu0 0.0
        %453 = vmatmul.mubr.f32.gmra.mrb[0].mxu0 %v225
        %v454 = vpop.f32.mrb[0].mxu0
        %v455 = vadd.f32 %v291, %v454
        %v456 = vpop.f32.mrb[0].mxu0
        %457 = vmatprep.mubr.f32.mxu0 0.0
        %458 = vmatmul.mubr.f32.gmra.mrb[0].mxu0 %v226
        %v459 = vpop.f32.mrb[0].mxu0
        %v460 = vadd.f32 %v291, %v459
        %v461 = vpop.f32.mrb[0].mxu0
        %462 = vmatprep.mubr.f32.mxu0 0.0
        %463 = vmatmul.mubr.f32.gmra.mrb[0].mxu0 %v227
        %v464 = vpop.f32.mrb[0].mxu0
        %v465 = vadd.f32 %v291, %v464
        %v466 = vpop.f32.mrb[0].mxu0
        %467 = vmatprep.mubr.f32.mxu0 0.0
        %468 = vmatmul.mubr.f32.gmra.mrb[0].mxu0 %v228
        %v469 = vpop.f32.mrb[0].mxu0
        %v470 = vadd.f32 %v291, %v469
        %v471 = vpop.f32.mrb[0].mxu0
        %472 = vmatprep.mubr.f32.mxu0 0.0
        %473 = vmatmul.mubr.f32.gmra.mrb[0].mxu0 %v229
        %v474 = vpop.f32.mrb[0].mxu0
        %v475 = vadd.f32 %v291, %v474
        %v476 = vpop.f32.mrb[0].mxu0
        %477 = vmatprep.mubr.f32.mxu0 0.0
        %478 = vmatmul.mubr.f32.gmra.mrb[0].mxu0 %v230
        %v479 = vpop.f32.mrb[0].mxu0
        %v480 = vadd.f32 %v291, %v479
        %v481 = vpop.f32.mrb[0].mxu0
        %482 = vmatprep.mubr.f32.mxu0 0.0
        %483 = vmatmul.mubr.f32.gmra.mrb[0].mxu0 %v231
        %v484 = vpop.f32.mrb[0].mxu0
        %v485 = vadd.f32 %v291, %v484
        %v486 = vpop.f32.mrb[0].mxu0
        %487 = vmatprep.mubr.f32.mxu0 0.0
        %488 = vmatmul.mubr.f32.gmra.mrb[0].mxu0 %v232
        %v489 = vpop.f32.mrb[0].mxu0
        %v490 = vadd.f32 %v291, %v489
        %v491 = vpop.f32.mrb[0].mxu0
        %492 = vmatprep.mubr.f32.mxu0 0.0
        %493 = vmatmul.mubr.f32.gmra.mrb[0].mxu0 %v233
        %v494 = vpop.f32.mrb[0].mxu0
        %v495 = vadd.f32 %v291, %v494
        %v496 = vpop.f32.mrb[0].mxu0
        %497 = vmatprep.mubr.f32.mxu0 0.0
        %498 = vmatmul.mubr.f32.gmra.mrb[0].mxu0 %v234
        %v499 = vpop.f32.mrb[0].mxu0
        %v500 = vadd.f32 %v291, %v499
        %v501 = vpop.f32.mrb[0].mxu0
        %502 = vmatprep.mubr.f32.mxu0 0.0
        %503 = vmatmul.mubr.f32.gmra.mrb[0].mxu0 %v235
        %v504 = vpop.f32.mrb[0].mxu0
        %v505 = vadd.f32 %v291, %v504
        %v506 = vpop.f32.mrb[0].mxu0
        %507 = vmatprep.mubr.f32.mxu0 0.0
        %508 = vmatmul.mubr.f32.gmra.mrb[0].mxu0 %v236
        %v509 = vpop.f32.mrb[0].mxu0
        %v510 = vadd.f32 %v291, %v509
        %v511 = vpop.f32.mrb[0].mxu0
        %512 = vmatprep.mubr.f32.mxu0 0.0
        %513 = vmatmul.mubr.f32.gmra.mrb[0].mxu0 %v237
        %v514 = vpop.f32.mrb[0].mxu0
        %v515 = vadd.f32 %v291, %v514
        %v516 = vpop.f32.mrb[0].mxu0
        %517 = vmatprep.mubr.f32.mxu0 0.0
        %518 = vmatmul.mubr.f32.gmra.mrb[0].mxu0 %v238
        %v519 = vpop.f32.mrb[0].mxu0
        %v520 = vadd.f32 %v291, %v519
        %v521 = vpop.f32.mrb[0].mxu0
        %522 = vmatprep.mubr.f32.mxu0 0.0
        %523 = vmatmul.mubr.f32.gmra.mrb[0].mxu0 %v239
        %v524 = vpop.f32.mrb[0].mxu0
        %v525 = vadd.f32 %v291, %v524
        %v526 = vpop.f32.mrb[0].mxu0
        %527 = vmatprep.mubr.f32.mxu0 0.0
        %528 = vmatmul.mubr.f32.gmra.mrb[0].mxu0 %v240
        %v529 = vpop.f32.mrb[0].mxu0
        %v530 = vadd.f32 %v291, %v529
        %v531 = vpop.f32.mrb[0].mxu0
        %532 = vmatprep.mubr.f32.mxu0 0.0
        %533 = vmatmul.mubr.f32.gmra.mrb[0].mxu0 %v241
        %v534 = vpop.f32.mrb[0].mxu0
        %v535 = vadd.f32 %v291, %v534
        %v536 = vpop.f32.mrb[0].mxu0
        %537 = vmatprep.mubr.f32.mxu0 0.0
        %538 = vmatmul.mubr.f32.gmra.mrb[0].mxu0 %v242
        %v539 = vpop.f32.mrb[0].mxu0
        %v540 = vadd.f32 %v291, %v539
        %v541 = vpop.f32.mrb[0].mxu0
        %542 = vmatprep.mubr.f32.mxu0 0.0
        %543 = vmatmul.mubr.f32.gmra.mrb[0].mxu0 %v243
        %v544 = vpop.f32.mrb[0].mxu0
        %v545 = vadd.f32 %v291, %v544
        %v546 = vpop.f32.mrb[0].mxu0
        %547 = vmatprep.mubr.f32.mxu0 0.0
        %548 = vmatmul.mubr.f32.gmra.mrb[0].mxu0 %v244
        %v549 = vpop.f32.mrb[0].mxu0
        %v550 = vadd.f32 %v291, %v549
        %v551 = vpop.f32.mrb[0].mxu0
        %552 = vmatprep.mubr.f32.mxu0 0.0
        %553 = vmatmul.mubr.f32.gmra.mrb[0].mxu0 %v245
        %v554 = vpop.f32.mrb[0].mxu0
        %v555 = vadd.f32 %v291, %v554
        %v556 = vpop.f32.mrb[0].mxu0
        %557 = vmatprep.mubr.f32.mxu0 0.0
        %558 = vmatmul.mubr.f32.gmra.mrb[0].mxu0 %v246
        %v559 = vpop.f32.mrb[0].mxu0
        %v560 = vadd.f32 %v291, %v559
        %v561 = vpop.f32.mrb[0].mxu0
        %562 = vmatprep.mubr.f32.mxu0 0.0
        %563 = vmatmul.mubr.f32.gmra.mrb[0].mxu0 %v247
        %v564 = vpop.f32.mrb[0].mxu0
        %v565 = vadd.f32 %v291, %v564
        %v566 = vpop.f32.mrb[0].mxu0
        %567 = vmatprep.mubr.f32.mxu0 0.0
        %568 = vmatmul.mubr.f32.gmra.mrb[0].mxu0 %v248
        %v569 = vpop.f32.mrb[0].mxu0
        %v570 = vadd.f32 %v291, %v569
        %v571 = vpop.f32.mrb[0].mxu0
        %572 = vmatprep.mubr.f32.mxu0 0.0
        %573 = vmatmul.mubr.f32.gmra.mrb[0].mxu0 %v249
        %v574 = vpop.f32.mrb[0].mxu0
        %v575 = vadd.f32 %v291, %v574
        %v576 = vpop.f32.mrb[0].mxu0
        %577 = vmatprep.mubr.f32.mxu0 0.0
        %578 = vmatmul.mubr.f32.gmra.mrb[0].mxu0 %v250
        %v579 = vpop.f32.mrb[0].mxu0
        %v580 = vadd.f32 %v291, %v579
        %v581 = vpop.f32.mrb[0].mxu0
        %582 = vmatprep.mubr.f32.mxu0 0.0
        %583 = vmatmul.mubr.f32.gmra.mrb[0].mxu0 %v251
        %v584 = vpop.f32.mrb[0].mxu0
        %v585 = vadd.f32 %v291, %v584
        %v586 = vpop.f32.mrb[0].mxu0
        %587 = vmatprep.mubr.f32.mxu0 0.0
        %588 = vmatmul.mubr.f32.gmra.mrb[0].mxu0 %v252
        %v589 = vpop.f32.mrb[0].mxu0
        %v590 = vadd.f32 %v291, %v589
        %v591 = vpop.f32.mrb[0].mxu0
        %592 = vmatprep.mubr.f32.mxu0 0.0
        %593 = vmatmul.mubr.f32.gmra.mrb[0].mxu0 %v253
        %v594 = vpop.f32.mrb[0].mxu0
        %v595 = vadd.f32 %v291, %v594
        %v596 = vpop.f32.mrb[0].mxu0
        %597 = vmatprep.mubr.f32.mxu0 0.0
        %598 = vmatmul.mubr.f32.gmra.mrb[0].mxu0 %v254
        %v599 = vpop.f32.mrb[0].mxu0
        %v600 = vadd.f32 %v291, %v599
        %v601 = vpop.f32.mrb[0].mxu0
        %602 = vmatprep.mubr.f32.mxu0 0.0
        %603 = vmatmul.mubr.f32.gmra.mrb[0].mxu0 %v255
        %v604 = vpop.f32.mrb[0].mxu0
        %v605 = vadd.f32 %v291, %v604
        %v606 = vpop.f32.mrb[0].mxu0
        %607 = vmatprep.mubr.f32.mxu0 0.0
        %608 = vmatmul.mubr.f32.gmra.mrb[0].mxu0 %v256
        %v609 = vpop.f32.mrb[0].mxu0
        %v610 = vadd.f32 %v291, %v609
        %v611 = vpop.f32.mrb[0].mxu0
        %612 = vmatprep.mubr.f32.mxu0 0.0
        %613 = vmatmul.mubr.f32.gmra.mrb[0].mxu0 %v257
        %v614 = vpop.f32.mrb[0].mxu0
        %v615 = vadd.f32 %v291, %v614
        %v616 = vpop.f32.mrb[0].mxu0
        %617 = vmatprep.mubr.f32.mxu0 0.0
        %618 = vmatmul.mubr.f32.gmra.mrb[0].mxu0 %v258
        %v619 = vpop.f32.mrb[0].mxu0
        %v620 = vadd.f32 %v291, %v619
        %v621 = vpop.f32.mrb[0].mxu0
        %622 = vmatprep.mubr.f32.mxu0 0.0
        %623 = vmatmul.mubr.f32.gmra.mrb[0].mxu0 %v259
        %v624 = vpop.f32.mrb[0].mxu0
        %v625 = vadd.f32 %v291, %v624
        %v626 = vpop.f32.mrb[0].mxu0
        %627 = vmatprep.mubr.f32.mxu0 0.0
        %628 = vmatmul.mubr.f32.gmra.mrb[0].mxu0 %v260
        %v629 = vpop.f32.mrb[0].mxu0
        %v630 = vadd.f32 %v291, %v629
        %v631 = vpop.f32.mrb[0].mxu0
        %632 = vmatprep.mubr.f32.mxu0 0.0
        %633 = vmatmul.mubr.f32.gmra.mrb[0].mxu0 %v261
        %v634 = vpop.f32.mrb[0].mxu0
        %v635 = vadd.f32 %v291, %v634
        %v636 = vpop.f32.mrb[0].mxu0
        %637 = vmatprep.mubr.f32.mxu0 0.0
        %638 = vmatmul.mubr.f32.gmra.mrb[0].mxu0 %v262
        %v639 = vpop.f32.mrb[0].mxu0
        %v640 = vadd.f32 %v291, %v639
        %v641 = vpop.f32.mrb[0].mxu0
        %642 = vmatprep.mubr.f32.mxu0 0.0
        %643 = vmatmul.mubr.f32.gmra.mrb[0].mxu0 %v263
        %v644 = vpop.f32.mrb[0].mxu0
        %v645 = vadd.f32 %v291, %v644
        %v646 = vpop.f32.mrb[0].mxu0
        %647 = vmatprep.mubr.f32.mxu0 0.0
        %648 = vmatmul.mubr.f32.gmra.mrb[0].mxu0 %v264
        %v649 = vpop.f32.mrb[0].mxu0
        %v650 = vadd.f32 %v291, %v649
        %v651 = vpop.f32.mrb[0].mxu0
        %652 = vmatprep.mubr.f32.mxu0 0.0
        %653 = vmatmul.mubr.f32.gmra.mrb[0].mxu0 %v265
        %v654 = vpop.f32.mrb[0].mxu0
        %v655 = vadd.f32 %v291, %v654
        %v656 = vpop.f32.mrb[0].mxu0
        %657 = vmatprep.mubr.f32.mxu0 0.0
        %658 = vmatmul.mubr.f32.gmra.mrb[0].mxu0 %v266
        %v659 = vpop.f32.mrb[0].mxu0
        %v660 = vadd.f32 %v291, %v659
        %v661 = vpop.f32.mrb[0].mxu0
        %662 = vmatprep.mubr.f32.mxu0 0.0
        %663 = vmatmul.mubr.f32.gmra.mrb[0].mxu0 %v267
        %v664 = vpop.f32.mrb[0].mxu0
        %v665 = vadd.f32 %v291, %v664
        %v666 = vpop.f32.mrb[0].mxu0
        %667 = vmatprep.mubr.f32.mxu0 0.0
        %668 = vmatmul.mubr.f32.gmra.mrb[0].mxu0 %v268
        %v669 = vpop.f32.mrb[0].mxu0
        %v670 = vadd.f32 %v291, %v669
        %v671 = vpop.f32.mrb[0].mxu0
        %672 = vmatprep.mubr.f32.mxu0 0.0
        %673 = vmatmul.mubr.f32.gmra.mrb[0].mxu0 %v269
        %v674 = vpop.f32.mrb[0].mxu0
        %v675 = vadd.f32 %v291, %v674
        %v676 = vpop.f32.mrb[0].mxu0
        %677 = vdwg.mxu0
        %v678 = vxor.u32 %v360, 2147483648
        %v679 = vxor.u32 %v365, 2147483648
        %v680 = vxor.u32 %v370, 2147483648
        %v681 = vxor.u32 %v375, 2147483648
        %v682 = vxor.u32 %v380, 2147483648
        %v683 = vxor.u32 %v385, 2147483648
        %v684 = vxor.u32 %v390, 2147483648
        %v685 = vxor.u32 %v395, 2147483648
        %v686 = vxor.u32 %v400, 2147483648
        %v687 = vxor.u32 %v405, 2147483648
        %v688 = vxor.u32 %v410, 2147483648
        %v689 = vxor.u32 %v415, 2147483648
        %v690 = vxor.u32 %v420, 2147483648
        %v691 = vxor.u32 %v425, 2147483648
        %v692 = vxor.u32 %v430, 2147483648
        %v693 = vxor.u32 %v435, 2147483648
        %v694 = vxor.u32 %v440, 2147483648
        %v695 = vxor.u32 %v445, 2147483648
        %v696 = vxor.u32 %v450, 2147483648
        %v697 = vxor.u32 %v455, 2147483648
        %v698 = vxor.u32 %v460, 2147483648
        %v699 = vxor.u32 %v465, 2147483648
        %v700 = vxor.u32 %v470, 2147483648
        %v701 = vxor.u32 %v475, 2147483648
        %v702 = vxor.u32 %v480, 2147483648
        %v703 = vxor.u32 %v485, 2147483648
        %v704 = vxor.u32 %v490, 2147483648
        %v705 = vxor.u32 %v495, 2147483648
        %v706 = vxor.u32 %v500, 2147483648
        %v707 = vxor.u32 %v505, 2147483648
        %v708 = vxor.u32 %v510, 2147483648
        %v709 = vxor.u32 %v515, 2147483648
        %v710 = vxor.u32 %v520, 2147483648
        %v711 = vxor.u32 %v525, 2147483648
        %v712 = vxor.u32 %v530, 2147483648
        %v713 = vxor.u32 %v535, 2147483648
        %v714 = vxor.u32 %v540, 2147483648
        %v715 = vxor.u32 %v545, 2147483648
        %v716 = vxor.u32 %v550, 2147483648
        %v717 = vxor.u32 %v555, 2147483648
        %v718 = vxor.u32 %v560, 2147483648
        %v719 = vxor.u32 %v565, 2147483648
        %v720 = vxor.u32 %v570, 2147483648
        %v721 = vxor.u32 %v575, 2147483648
        %v722 = vxor.u32 %v580, 2147483648
        %v723 = vxor.u32 %v585, 2147483648
        %v724 = vxor.u32 %v590, 2147483648
        %v725 = vxor.u32 %v595, 2147483648
        %v726 = vxor.u32 %v600, 2147483648
        %v727 = vxor.u32 %v605, 2147483648
        %v728 = vxor.u32 %v610, 2147483648
        %v729 = vxor.u32 %v615, 2147483648
        %v730 = vxor.u32 %v620, 2147483648
        %v731 = vxor.u32 %v625, 2147483648
        %v732 = vxor.u32 %v630, 2147483648
        %v733 = vxor.u32 %v635, 2147483648
        %v734 = vxor.u32 %v640, 2147483648
        %v735 = vxor.u32 %v645, 2147483648
        %v736 = vxor.u32 %v650, 2147483648
        %v737 = vxor.u32 %v655, 2147483648
        %v738 = vxor.u32 %v660, 2147483648
        %v739 = vxor.u32 %v665, 2147483648
        %v740 = vxor.u32 %v670, 2147483648
        %v741 = vxor.u32 %v675, 2147483648
        %v742 = vmul.f32 %v678, 1.442695
        %v743 = vpow.pop %v742
        %v744 = vmul.f32 %v679, 1.442695
        %v745 = vpow.pop %v744
        %v746 = vmul.f32 %v680, 1.442695
        %v747 = vpow.pop %v746
        %v748 = vmul.f32 %v681, 1.442695
        %v749 = vpow.pop %v748
        %v750 = vmul.f32 %v682, 1.442695
        %v751 = vpow.pop %v750
        %v752 = vmul.f32 %v683, 1.442695
        %v753 = vpow.pop %v752
        %v754 = vmul.f32 %v684, 1.442695
        %v755 = vpow.pop %v754
        %v756 = vmul.f32 %v685, 1.442695
        %v757 = vpow.pop %v756
        %v758 = vmul.f32 %v686, 1.442695
        %v759 = vpow.pop %v758
        %v760 = vmul.f32 %v687, 1.442695
        %v761 = vpow.pop %v760
        %v762 = vmul.f32 %v688, 1.442695
        %v763 = vpow.pop %v762
        %v764 = vmul.f32 %v689, 1.442695
        %v765 = vpow.pop %v764
        %v766 = vmul.f32 %v690, 1.442695
        %v767 = vpow.pop %v766
        %v768 = vmul.f32 %v691, 1.442695
        %v769 = vpow.pop %v768
        %v770 = vmul.f32 %v692, 1.442695
        %v771 = vpow.pop %v770
        %v772 = vmul.f32 %v693, 1.442695
        %v773 = vpow.pop %v772
        %v774 = vmul.f32 %v694, 1.442695
        %v775 = vpow.pop %v774
        %v776 = vmul.f32 %v695, 1.442695
        %v777 = vpow.pop %v776
        %v778 = vmul.f32 %v696, 1.442695
        %v779 = vpow.pop %v778
        %v780 = vmul.f32 %v697, 1.442695
        %v781 = vpow.pop %v780
        %v782 = vmul.f32 %v698, 1.442695
        %v783 = vpow.pop %v782
        %v784 = vmul.f32 %v699, 1.442695
        %v785 = vpow.pop %v784
        %v786 = vmul.f32 %v700, 1.442695
        %v787 = vpow.pop %v786
        %v788 = vmul.f32 %v701, 1.442695
        %v789 = vpow.pop %v788
        %v790 = vmul.f32 %v702, 1.442695
        %v791 = vpow.pop %v790
        %v792 = vmul.f32 %v703, 1.442695
        %v793 = vpow.pop %v792
        %v794 = vmul.f32 %v704, 1.442695
        %v795 = vpow.pop %v794
        %v796 = vmul.f32 %v705, 1.442695
        %v797 = vpow.pop %v796
        %v798 = vmul.f32 %v706, 1.442695
        %v799 = vpow.pop %v798
        %v800 = vmul.f32 %v707, 1.442695
        %v801 = vpow.pop %v800
        %v802 = vmul.f32 %v708, 1.442695
        %v803 = vpow.pop %v802
        %v804 = vmul.f32 %v709, 1.442695
        %v805 = vpow.pop %v804
        %v806 = vmul.f32 %v710, 1.442695
        %v807 = vpow.pop %v806
        %v808 = vmul.f32 %v711, 1.442695
        %v809 = vpow.pop %v808
        %v810 = vmul.f32 %v712, 1.442695
        %v811 = vpow.pop %v810
        %v812 = vmul.f32 %v713, 1.442695
        %v813 = vpow.pop %v812
        %v814 = vmul.f32 %v714, 1.442695
        %v815 = vpow.pop %v814
        %v816 = vmul.f32 %v715, 1.442695
        %v817 = vpow.pop %v816
        %v818 = vmul.f32 %v716, 1.442695
        %v819 = vpow.pop %v818
        %v820 = vmul.f32 %v717, 1.442695
        %v821 = vpow.pop %v820
        %v822 = vmul.f32 %v718, 1.442695
        %v823 = vpow.pop %v822
        %v824 = vmul.f32 %v719, 1.442695
        %v825 = vpow.pop %v824
        %v826 = vmul.f32 %v720, 1.442695
        %v827 = vpow.pop %v826
        %v828 = vmul.f32 %v721, 1.442695
        %v829 = vpow.pop %v828
        %v830 = vmul.f32 %v722, 1.442695
        %v831 = vpow.pop %v830
        %v832 = vmul.f32 %v723, 1.442695
        %v833 = vpow.pop %v832
        %v834 = vmul.f32 %v724, 1.442695
        %v835 = vpow.pop %v834
        %v836 = vmul.f32 %v725, 1.442695
        %v837 = vpow.pop %v836
        %v838 = vmul.f32 %v726, 1.442695
        %v839 = vpow.pop %v838
        %v840 = vmul.f32 %v727, 1.442695
        %v841 = vpow.pop %v840
        %v842 = vmul.f32 %v728, 1.442695
        %v843 = vpow.pop %v842
        %v844 = vmul.f32 %v729, 1.442695
        %v845 = vpow.pop %v844
        %v846 = vmul.f32 %v730, 1.442695
        %v847 = vpow.pop %v846
        %v848 = vmul.f32 %v731, 1.442695
        %v849 = vpow.pop %v848
        %v850 = vmul.f32 %v732, 1.442695
        %v851 = vpow.pop %v850
        %v852 = vmul.f32 %v733, 1.442695
        %v853 = vpow.pop %v852
        %v854 = vmul.f32 %v734, 1.442695
        %v855 = vpow.pop %v854
        %v856 = vmul.f32 %v735, 1.442695
        %v857 = vpow.pop %v856
        %v858 = vmul.f32 %v736, 1.442695
        %v859 = vpow.pop %v858
        %v860 = vmul.f32 %v737, 1.442695
        %v861 = vpow.pop %v860
        %v862 = vmul.f32 %v738, 1.442695
        %v863 = vpow.pop %v862
        %v864 = vmul.f32 %v739, 1.442695
        %v865 = vpow.pop %v864
        %v866 = vmul.f32 %v740, 1.442695
        %v867 = vpow.pop %v866
        %v868 = vmul.f32 %v741, 1.442695
        %v869 = vpow.pop %v868
        %v870 = vadd.f32 %v743, 1.0
        %v871 = vadd.f32 %v745, 1.0
        %v872 = vadd.f32 %v747, 1.0
        %v873 = vadd.f32 %v749, 1.0
        %v874 = vadd.f32 %v751, 1.0
        %v875 = vadd.f32 %v753, 1.0
        %v876 = vadd.f32 %v755, 1.0
        %v877 = vadd.f32 %v757, 1.0
        %v878 = vadd.f32 %v759, 1.0
        %v879 = vadd.f32 %v761, 1.0
        %v880 = vadd.f32 %v763, 1.0
        %v881 = vadd.f32 %v765, 1.0
        %v882 = vadd.f32 %v767, 1.0
        %v883 = vadd.f32 %v769, 1.0
        %v884 = vadd.f32 %v771, 1.0
        %v885 = vadd.f32 %v773, 1.0
        %v886 = vadd.f32 %v775, 1.0
        %v887 = vadd.f32 %v777, 1.0
        %v888 = vadd.f32 %v779, 1.0
        %v889 = vadd.f32 %v781, 1.0
        %v890 = vadd.f32 %v783, 1.0
        %v891 = vadd.f32 %v785, 1.0
        %v892 = vadd.f32 %v787, 1.0
        %v893 = vadd.f32 %v789, 1.0
        %v894 = vadd.f32 %v791, 1.0
        %v895 = vadd.f32 %v793, 1.0
        %v896 = vadd.f32 %v795, 1.0
        %v897 = vadd.f32 %v797, 1.0
        %v898 = vadd.f32 %v799, 1.0
        %v899 = vadd.f32 %v801, 1.0
        %v900 = vadd.f32 %v803, 1.0
        %v901 = vadd.f32 %v805, 1.0
        %v902 = vadd.f32 %v807, 1.0
        %v903 = vadd.f32 %v809, 1.0
        %v904 = vadd.f32 %v811, 1.0
        %v905 = vadd.f32 %v813, 1.0
        %v906 = vadd.f32 %v815, 1.0
        %v907 = vadd.f32 %v817, 1.0
        %v908 = vadd.f32 %v819, 1.0
        %v909 = vadd.f32 %v821, 1.0
        %v910 = vadd.f32 %v823, 1.0
        %v911 = vadd.f32 %v825, 1.0
        %v912 = vadd.f32 %v827, 1.0
        %v913 = vadd.f32 %v829, 1.0
        %v914 = vadd.f32 %v831, 1.0
        %v915 = vadd.f32 %v833, 1.0
        %v916 = vadd.f32 %v835, 1.0
        %v917 = vadd.f32 %v837, 1.0
        %v918 = vadd.f32 %v839, 1.0
        %v919 = vadd.f32 %v841, 1.0
        %v920 = vadd.f32 %v843, 1.0
        %v921 = vadd.f32 %v845, 1.0
        %v922 = vadd.f32 %v847, 1.0
        %v923 = vadd.f32 %v849, 1.0
        %v924 = vadd.f32 %v851, 1.0
        %v925 = vadd.f32 %v853, 1.0
        %v926 = vadd.f32 %v855, 1.0
        %v927 = vadd.f32 %v857, 1.0
        %v928 = vadd.f32 %v859, 1.0
        %v929 = vadd.f32 %v861, 1.0
        %v930 = vadd.f32 %v863, 1.0
        %v931 = vadd.f32 %v865, 1.0
        %v932 = vadd.f32 %v867, 1.0
        %v933 = vadd.f32 %v869, 1.0
        %v934 = vrcp.pop %v870
        %v935 = vmul.f32 1.0, %v934
        %v936 = vrcp.pop %v871
        %v937 = vmul.f32 1.0, %v936
        %v938 = vrcp.pop %v872
        %v939 = vmul.f32 1.0, %v938
        %v940 = vrcp.pop %v873
        %v941 = vmul.f32 1.0, %v940
        %v942 = vrcp.pop %v874
        %v943 = vmul.f32 1.0, %v942
        %v944 = vrcp.pop %v875
        %v945 = vmul.f32 1.0, %v944
        %v946 = vrcp.pop %v876
        %v947 = vmul.f32 1.0, %v946
        %v948 = vrcp.pop %v877
        %v949 = vmul.f32 1.0, %v948
        %v950 = vrcp.pop %v878
        %v951 = vmul.f32 1.0, %v950
        %v952 = vrcp.pop %v879
        %v953 = vmul.f32 1.0, %v952
        %v954 = vrcp.pop %v880
        %v955 = vmul.f32 1.0, %v954
        %v956 = vrcp.pop %v881
        %v957 = vmul.f32 1.0, %v956
        %v958 = vrcp.pop %v882
        %v959 = vmul.f32 1.0, %v958
        %v960 = vrcp.pop %v883
        %v961 = vmul.f32 1.0, %v960
        %v962 = vrcp.pop %v884
        %v963 = vmul.f32 1.0, %v962
        %v964 = vrcp.pop %v885
        %v965 = vmul.f32 1.0, %v964
        %v966 = vrcp.pop %v886
        %v967 = vmul.f32 1.0, %v966
        %v968 = vrcp.pop %v887
        %v969 = vmul.f32 1.0, %v968
        %v970 = vrcp.pop %v888
        %v971 = vmul.f32 1.0, %v970
        %v972 = vrcp.pop %v889
        %v973 = vmul.f32 1.0, %v972
        %v974 = vrcp.pop %v890
        %v975 = vmul.f32 1.0, %v974
        %v976 = vrcp.pop %v891
        %v977 = vmul.f32 1.0, %v976
        %v978 = vrcp.pop %v892
        %v979 = vmul.f32 1.0, %v978
        %v980 = vrcp.pop %v893
        %v981 = vmul.f32 1.0, %v980
        %v982 = vrcp.pop %v894
        %v983 = vmul.f32 1.0, %v982
        %v984 = vrcp.pop %v895
        %v985 = vmul.f32 1.0, %v984
        %v986 = vrcp.pop %v896
        %v987 = vmul.f32 1.0, %v986
        %v988 = vrcp.pop %v897
        %v989 = vmul.f32 1.0, %v988
        %v990 = vrcp.pop %v898
        %v991 = vmul.f32 1.0, %v990
        %v992 = vrcp.pop %v899
        %v993 = vmul.f32 1.0, %v992
        %v994 = vrcp.pop %v900
        %v995 = vmul.f32 1.0, %v994
        %v996 = vrcp.pop %v901
        %v997 = vmul.f32 1.0, %v996
        %v998 = vrcp.pop %v902
        %v999 = vmul.f32 1.0, %v998
        %v1000 = vrcp.pop %v903
        %v1001 = vmul.f32 1.0, %v1000
        %v1002 = vrcp.pop %v904
        %v1003 = vmul.f32 1.0, %v1002
        %v1004 = vrcp.pop %v905
        %v1005 = vmul.f32 1.0, %v1004
        %v1006 = vrcp.pop %v906
        %v1007 = vmul.f32 1.0, %v1006
        %v1008 = vrcp.pop %v907
        %v1009 = vmul.f32 1.0, %v1008
        %v1010 = vrcp.pop %v908
        %v1011 = vmul.f32 1.0, %v1010
        %v1012 = vrcp.pop %v909
        %v1013 = vmul.f32 1.0, %v1012
        %v1014 = vrcp.pop %v910
        %v1015 = vmul.f32 1.0, %v1014
        %v1016 = vrcp.pop %v911
        %v1017 = vmul.f32 1.0, %v1016
        %v1018 = vrcp.pop %v912
        %v1019 = vmul.f32 1.0, %v1018
        %v1020 = vrcp.pop %v913
        %v1021 = vmul.f32 1.0, %v1020
        %v1022 = vrcp.pop %v914
        %v1023 = vmul.f32 1.0, %v1022
        %v1024 = vrcp.pop %v915
        %v1025 = vmul.f32 1.0, %v1024
        %v1026 = vrcp.pop %v916
        %v1027 = vmul.f32 1.0, %v1026
        %v1028 = vrcp.pop %v917
        %v1029 = vmul.f32 1.0, %v1028
        %v1030 = vrcp.pop %v918
        %v1031 = vmul.f32 1.0, %v1030
        %v1032 = vrcp.pop %v919
        %v1033 = vmul.f32 1.0, %v1032
        %v1034 = vrcp.pop %v920
        %v1035 = vmul.f32 1.0, %v1034
        %v1036 = vrcp.pop %v921
        %v1037 = vmul.f32 1.0, %v1036
        %v1038 = vrcp.pop %v922
        %v1039 = vmul.f32 1.0, %v1038
        %v1040 = vrcp.pop %v923
        %v1041 = vmul.f32 1.0, %v1040
        %v1042 = vrcp.pop %v924
        %v1043 = vmul.f32 1.0, %v1042
        %v1044 = vrcp.pop %v925
        %v1045 = vmul.f32 1.0, %v1044
        %v1046 = vrcp.pop %v926
        %v1047 = vmul.f32 1.0, %v1046
        %v1048 = vrcp.pop %v927
        %v1049 = vmul.f32 1.0, %v1048
        %v1050 = vrcp.pop %v928
        %v1051 = vmul.f32 1.0, %v1050
        %v1052 = vrcp.pop %v929
        %v1053 = vmul.f32 1.0, %v1052
        %v1054 = vrcp.pop %v930
        %v1055 = vmul.f32 1.0, %v1054
        %v1056 = vrcp.pop %v931
        %v1057 = vmul.f32 1.0, %v1056
        %v1058 = vrcp.pop %v932
        %v1059 = vmul.f32 1.0, %v1058
        %v1060 = vrcp.pop %v933
        %v1061 = vmul.f32 1.0, %v1060
        %v1062 = vmul.f32 %v206, %v935
        %v1063 = vmul.f32 %v207, %v937
        %v1064 = vmul.f32 %v208, %v939
        %v1065 = vmul.f32 %v209, %v941
        %v1066 = vmul.f32 %v210, %v943
        %v1067 = vmul.f32 %v211, %v945
        %v1068 = vmul.f32 %v212, %v947
        %v1069 = vmul.f32 %v213, %v949
        %v1070 = vmul.f32 %v214, %v951
        %v1071 = vmul.f32 %v215, %v953
        %v1072 = vmul.f32 %v216, %v955
        %v1073 = vmul.f32 %v217, %v957
        %v1074 = vmul.f32 %v218, %v959
        %v1075 = vmul.f32 %v219, %v961
        %v1076 = vmul.f32 %v220, %v963
        %v1077 = vmul.f32 %v221, %v965
        %v1078 = vmul.f32 %v222, %v967
        %v1079 = vmul.f32 %v223, %v969
        %v1080 = vmul.f32 %v224, %v971
        %v1081 = vmul.f32 %v225, %v973
        %v1082 = vmul.f32 %v226, %v975
        %v1083 = vmul.f32 %v227, %v977
        %v1084 = vmul.f32 %v228, %v979
        %v1085 = vmul.f32 %v229, %v981
        %v1086 = vmul.f32 %v230, %v983
        %v1087 = vmul.f32 %v231, %v985
        %v1088 = vmul.f32 %v232, %v987
        %v1089 = vmul.f32 %v233, %v989
        %v1090 = vmul.f32 %v234, %v991
        %v1091 = vmul.f32 %v235, %v993
        %v1092 = vmul.f32 %v236, %v995
        %v1093 = vmul.f32 %v237, %v997
        %v1094 = vmul.f32 %v238, %v999
        %v1095 = vmul.f32 %v239, %v1001
        %v1096 = vmul.f32 %v240, %v1003
        %v1097 = vmul.f32 %v241, %v1005
        %v1098 = vmul.f32 %v242, %v1007
        %v1099 = vmul.f32 %v243, %v1009
        %v1100 = vmul.f32 %v244, %v1011
        %v1101 = vmul.f32 %v245, %v1013
        %v1102 = vmul.f32 %v246, %v1015
        %v1103 = vmul.f32 %v247, %v1017
        %v1104 = vmul.f32 %v248, %v1019
        %v1105 = vmul.f32 %v249, %v1021
        %v1106 = vmul.f32 %v250, %v1023
        %v1107 = vmul.f32 %v251, %v1025
        %v1108 = vmul.f32 %v252, %v1027
        %v1109 = vmul.f32 %v253, %v1029
        %v1110 = vmul.f32 %v254, %v1031
        %v1111 = vmul.f32 %v255, %v1033
        %v1112 = vmul.f32 %v256, %v1035
        %v1113 = vmul.f32 %v257, %v1037
        %v1114 = vmul.f32 %v258, %v1039
        %v1115 = vmul.f32 %v259, %v1041
        %v1116 = vmul.f32 %v260, %v1043
        %v1117 = vmul.f32 %v261, %v1045
        %v1118 = vmul.f32 %v262, %v1047
        %v1119 = vmul.f32 %v263, %v1049
        %v1120 = vmul.f32 %v264, %v1051
        %v1121 = vmul.f32 %v265, %v1053
        %v1122 = vmul.f32 %v266, %v1055
        %v1123 = vmul.f32 %v267, %v1057
        %v1124 = vmul.f32 %v268, %v1059
        %v1125 = vmul.f32 %v269, %v1061
        %1126 = vst [vmem:[%s203] sm:$0xff] %v1062
        %1127 = vst [vmem:[%s203 + $0x8] sm:$0xff] %v1063
        %1128 = vst [vmem:[%s203 + $0x10] sm:$0xff] %v1064
        %1129 = vst [vmem:[%s203 + $0x18] sm:$0xff] %v1065
        %1130 = vst [vmem:[%s203 + $0x20] sm:$0xff] %v1066
        %1131 = vst [vmem:[%s203 + $0x28] sm:$0xff] %v1067
        %1132 = vst [vmem:[%s203 + $0x30] sm:$0xff] %v1068
        %1133 = vst [vmem:[%s203 + $0x38] sm:$0xff] %v1069
        %1134 = vst [vmem:[%s203 + $0x40] sm:$0xff] %v1070
        %1135 = vst [vmem:[%s203 + $0x48] sm:$0xff] %v1071
        %1136 = vst [vmem:[%s203 + $0x50] sm:$0xff] %v1072
        %1137 = vst [vmem:[%s203 + $0x58] sm:$0xff] %v1073
        %1138 = vst [vmem:[%s203 + $0x60] sm:$0xff] %v1074
        %1139 = vst [vmem:[%s203 + $0x68] sm:$0xff] %v1075
        %1140 = vst [vmem:[%s203 + $0x70] sm:$0xff] %v1076
        %1141 = vst [vmem:[%s203 + $0x78] sm:$0xff] %v1077
        %1142 = vst [vmem:[%s203 + $0x80] sm:$0xff] %v1078
        %1143 = vst [vmem:[%s203 + $0x88] sm:$0xff] %v1079
        %1144 = vst [vmem:[%s203 + $0x90] sm:$0xff] %v1080
        %1145 = vst [vmem:[%s203 + $0x98] sm:$0xff] %v1081
        %1146 = vst [vmem:[%s203 + $0xa0] sm:$0xff] %v1082
        %1147 = vst [vmem:[%s203 + $0xa8] sm:$0xff] %v1083
        %1148 = vst [vmem:[%s203 + $0xb0] sm:$0xff] %v1084
        %1149 = vst [vmem:[%s203 + $0xb8] sm:$0xff] %v1085
        %1150 = vst [vmem:[%s203 + $0xc0] sm:$0xff] %v1086
        %1151 = vst [vmem:[%s203 + $0xc8] sm:$0xff] %v1087
        %1152 = vst [vmem:[%s203 + $0xd0] sm:$0xff] %v1088
        %1153 = vst [vmem:[%s203 + $0xd8] sm:$0xff] %v1089
        %1154 = vst [vmem:[%s203 + $0xe0] sm:$0xff] %v1090
        %1155 = vst [vmem:[%s203 + $0xe8] sm:$0xff] %v1091
        %1156 = vst [vmem:[%s203 + $0xf0] sm:$0xff] %v1092
        %1157 = vst [vmem:[%s203 + $0xf8] sm:$0xff] %v1093
        %1158 = vst [vmem:[%s203 + $0x100] sm:$0xff] %v1094
        %1159 = vst [vmem:[%s203 + $0x108] sm:$0xff] %v1095
        %1160 = vst [vmem:[%s203 + $0x110] sm:$0xff] %v1096
        %1161 = vst [vmem:[%s203 + $0x118] sm:$0xff] %v1097
        %1162 = vst [vmem:[%s203 + $0x120] sm:$0xff] %v1098
        %1163 = vst [vmem:[%s203 + $0x128] sm:$0xff] %v1099
        %1164 = vst [vmem:[%s203 + $0x130] sm:$0xff] %v1100
        %1165 = vst [vmem:[%s203 + $0x138] sm:$0xff] %v1101
        %1166 = vst [vmem:[%s203 + $0x140] sm:$0xff] %v1102
        %1167 = vst [vmem:[%s203 + $0x148] sm:$0xff] %v1103
        %1168 = vst [vmem:[%s203 + $0x150] sm:$0xff] %v1104
        %1169 = vst [vmem:[%s203 + $0x158] sm:$0xff] %v1105
        %1170 = vst [vmem:[%s203 + $0x160] sm:$0xff] %v1106
        %1171 = vst [vmem:[%s203 + $0x168] sm:$0xff] %v1107
        %1172 = vst [vmem:[%s203 + $0x170] sm:$0xff] %v1108
        %1173 = vst [vmem:[%s203 + $0x178] sm:$0xff] %v1109
        %1174 = vst [vmem:[%s203 + $0x180] sm:$0xff] %v1110
        %1175 = vst [vmem:[%s203 + $0x188] sm:$0xff] %v1111
        %1176 = vst [vmem:[%s203 + $0x190] sm:$0xff] %v1112
        %1177 = vst [vmem:[%s203 + $0x198] sm:$0xff] %v1113
        %1178 = vst [vmem:[%s203 + $0x1a0] sm:$0xff] %v1114
        %1179 = vst [vmem:[%s203 + $0x1a8] sm:$0xff] %v1115
        %1180 = vst [vmem:[%s203 + $0x1b0] sm:$0xff] %v1116
        %1181 = vst [vmem:[%s203 + $0x1b8] sm:$0xff] %v1117
        %1182 = vst [vmem:[%s203 + $0x1c0] sm:$0xff] %v1118
        %1183 = vst [vmem:[%s203 + $0x1c8] sm:$0xff] %v1119
        %1184 = vst [vmem:[%s203 + $0x1d0] sm:$0xff] %v1120
        %1185 = vst [vmem:[%s203 + $0x1d8] sm:$0xff] %v1121
        %1186 = vst [vmem:[%s203 + $0x1e0] sm:$0xff] %v1122
        %1187 = vst [vmem:[%s203 + $0x1e8] sm:$0xff] %v1123
        %1188 = vst [vmem:[%s203 + $0x1f0] sm:$0xff] %v1124
        %1189 = vst [vmem:[%s203 + $0x1f8] sm:$0xff] %v1125
        %s1190 = sand.u32 %s97, 1
        %s1191 = scalar_lea.sflag [#allocation4], %s1190
        %s1192 = sand.u32 %s97, 1
        %s1193 = smul.addr %s1192, 512
        %s1194 = scalar_lea.vmem [#allocation7], %s1193
        // Predicated region
        $region41: #{tpu_custom_call.1} parent=31 // pred_check
          %p1195 = pneg %p107
        $region42: #{tpu_custom_call.1} parent=31 // pred_check_branch
          %1197 = sbr.rel (%p1195) target = $region44
        $region43: #{tpu_custom_call.1} parent=31 // pred_region
          %s1198 = smul.u32 64, %s21
          %s1200 = ssub.s32 8192, 8192
          %1201 = vsyncadd %s1191, %s1200
          %s1202 = smul.addr %s1198, 128
          %s1203 = scalar_lea.hbm %s3, %s1202
          %s1204 = sshll.u32 %s1194, 4
          %s1205 = int_to_ptr.vmem [resolvable:$true] %s1204
          %1210 = dma.vmem_to_hbm [thread:$0]  %s1205, 8192, %s1203, %s1191, 128, 128, 8
        $region44: #{tpu_custom_call.1} parent=31 // pred_fallthru
          _
      $region32: #{tpu_custom_call.1} parent=5 // pred_fallthru
        _
      %p1211 = scmp.le.s32.totalorder 2, %s16
      // Predicated region
      $region45: #{tpu_custom_call.1} parent=5 // pred_check
        %p1212 = pneg %p1211
      $region46: #{tpu_custom_call.1} parent=5 // pred_check_branch
        %1214 = sbr.rel (%p1212) target = $region48
      $region47: #{tpu_custom_call.1} parent=5 // pred_region
        %s1215 = ssub.s32 %s16, 2
        // Predicated region
        $region49: #{tpu_custom_call.1} parent=47 // pred_check
          %p1216 = pneg %p113
        $region50: #{tpu_custom_call.1} parent=47 // pred_check_branch
          %1218 = sbr.rel (%p1216) target = $region52
        $region51: #{tpu_custom_call.1} parent=47 // pred_region
          %s1219 = sand.u32 %s98, 1
          %s1220 = scalar_lea.sflag [#allocation4], %s1219
          %s1221 = sand.u32 %s98, 1
          %s1222 = smul.addr %s1221, 512
          %s1223 = scalar_lea.vmem [#allocation7], %s1222
          %1224 = dma.done %s1220, 8192
        $region52: #{tpu_custom_call.1} parent=47 // pred_fallthru
          _
      $region48: #{tpu_custom_call.1} parent=5 // pred_fallthru
        _
    $region6: #{tpu_custom_call.1} parent=1 // loop_footer
      %s20 = sadd.s32 1, %s16
    $region7: #{tpu_custom_call.1} parent=1 // loop_footer_branch
      %15 = sbr.rel target = $region3
    $region8: #{tpu_custom_call.1} parent=1 // loop_exit
      _
    %1225 = vsyncpa [#allocation3], 1
    %s1226 = scalar_lea.sflag [#allocation3], 1
    %1227 = vsyncpa %s1226, 1
    %1228 = vsyncpa [#allocation6], 1
    %1229 = vsyncpa [#allocation4], 1
    %s1230 = scalar_lea.sflag [#allocation4], 1
    %1231 = vsyncpa %s1230, 1

</llo_original>
